<compile_context>
chip_gen: v7x
topology: tpu7x:2x2x1
jax: 0.10.0
libtpu: 0.0.40
codegen_flags: <defaults>
</compile_context>

<pallas_src>
import math
import functools

import numpy as np
import jax
import jax.numpy as jnp
from jax import lax
from jax.experimental import pallas as pl
from jax.experimental.pallas import tpu as pltpu

# ----------------------------- small config -----------------------------
BATCH = 2
SEQ = 8
HIDDEN = 32
NUM_HEADS = 4
HEAD_DIM = HIDDEN // NUM_HEADS          # 8
NUM_KV_HEADS = 4                        # num_key_value_groups == 1
NUM_HIDDEN_LAYERS = 2
KB_LAYER_FREQUENCY = 1
LAYER_IDX = 0
KB_LEN = 8
KB_SCALE_FACTOR = 4                     # kb_config.kb_scale_factor
SEP_QUERY_HEAD = True
ROPE_THETA = 10000.0
MASK_MIN = float(jnp.finfo(jnp.bfloat16).min)   # PADDING_VALUE in the torch module


# ----------------------------- fused Pallas kernel -----------------------------
def _fused_kblam_kernel(x_ref, wqkv_ref, wo_ref, cos_ref, sin_ref,
                        kbk_ref, kbv_ref, hmask_ref, bias_ref, o_ref,
                        *, num_heads, kb_offset, sep_query_head):
    T, E = x_ref.shape                       # T = B*S (batch folded into sublanes)
    kb_len = kbk_ref.shape[0] // num_heads

    # ---- fused q/q2/k/v (+rotate_half streams) projection: one (T,E)@(E,6E) MXU op.
    #      1/sqrt(head_dim) and rotate_half are already folded into the weights. ----
    qkv = jnp.dot(x_ref[...], wqkv_ref[...],
                  preferred_element_type=jnp.float32)        # (T, 6E) f32
    q   = qkv[:, 0 * E:1 * E]
    q2  = qkv[:, 1 * E:2 * E]
    k   = qkv[:, 2 * E:3 * E]
    v   = qkv[:, 3 * E:4 * E]
    q_r = qkv[:, 4 * E:5 * E]                                # = rotate_half(q) (pre-scaled)
    k_r = qkv[:, 5 * E:6 * E]                                # = rotate_half(k)

    # ---- RoPE (cos/sin pre-tiled to (T, E); f32 VPU mul-adds) ----
    cos = cos_ref[...]
    sin = sin_ref[...]
    q = q * cos + q_r * sin
    k = k * cos + k_r * sin

    q_bf = q.astype(jnp.bfloat16)
    k_bf = k.astype(jnp.bfloat16)
    v_bf = v.astype(jnp.bfloat16)
    q_kb_bf = q2.astype(jnp.bfloat16) if sep_query_head else q_bf

    # ---- block-diagonal self key / value matrices so ALL heads and BOTH batches are
    #      handled by one logits matmul and one PV matmul (sublane concat + mask mul) ----
    hmask = hmask_ref[...]                                   # (H*T, E) 0/1 bf16
    k_bd = jnp.concatenate([k_bf] * num_heads, axis=0) * hmask   # (H*T, E)
    v_bd = jnp.concatenate([v_bf] * num_heads, axis=0) * hmask   # (H*T, E)

    dn = (((1,), (1,)), ((), ()))                            # contract over E on both sides
    # KB logits: (T, H*kb_len); sep query head only contracts against KB keys; the
    # -log(kb_len)+log(kb_scale_factor) offset is a compile-time scalar.
    aw_kb = lax.dot_general(q_kb_bf, kbk_ref[...], dn,
                            preferred_element_type=jnp.float32) + kb_offset
    # Self logits: (T, H*T); precomputed additive bias = causal within a batch,
    # MASK_MIN across batches (KB additive mask is identically zero for a causal mask).
    aw_sf = lax.dot_general(q_bf, k_bd, dn,
                            preferred_element_type=jnp.float32) + bias_ref[...]

    # ---- merged KB+self softmax: one max / one denominator per (query row, head) ----
    p_kb_parts = []
    p_sf_parts = []
    for h in range(num_heads):
        kb_h = aw_kb[:, h * kb_len:(h + 1) * kb_len]         # (T, kb_len)
        sf_h = aw_sf[:, h * T:(h + 1) * T]                   # (T, T)
        m = jnp.maximum(jnp.max(kb_h, axis=-1, keepdims=True),
                        jnp.max(sf_h, axis=-1, keepdims=True))
        e_kb = jnp.exp(kb_h - m)
        e_sf = jnp.exp(sf_h - m)
        inv = pl.reciprocal(jnp.sum(e_kb, axis=-1, keepdims=True)
                            + jnp.sum(e_sf, axis=-1, keepdims=True), approx=True)
        p_kb_parts.append((e_kb * inv).astype(jnp.bfloat16))
        p_sf_parts.append((e_sf * inv).astype(jnp.bfloat16))
    p_kb = jnp.concatenate(p_kb_parts, axis=-1)              # (T, H*kb_len)
    p_sf = jnp.concatenate(p_sf_parts, axis=-1)              # (T, H*T)

    # ---- PV: two batched matmuls against block-diagonal value matrices ----
    attn = (jnp.dot(p_kb, kbv_ref[...], preferred_element_type=jnp.float32)
            + jnp.dot(p_sf, v_bd, preferred_element_type=jnp.float32))   # (T, E) f32

    # ---- fused o_proj ----
    o_ref[...] = jnp.dot(attn.astype(jnp.bfloat16), wo_ref[...],
                         preferred_element_type=jnp.float32).astype(o_ref.dtype)


def kblam_attention_forward(prep, hidden_states):
    B, S, E = hidden_states.shape
    T = B * S
    # Batch folded into sublanes; bf16 DMA of the activations (review items 1 & 7).
    x2d = hidden_states.reshape(T, E).astype(jnp.bfloat16)

    kernel = functools.partial(
        _fused_kblam_kernel,
        num_heads=NUM_HEADS,
        kb_offset=prep["kb_offset"],
        sep_query_head=SEP_QUERY_HEAD,
    )
    # No grid: a single pipeline step; every operand is a whole-array VMEM block.
    vmem = pl.BlockSpec(memory_space=pltpu.MemorySpace.VMEM)
    out2d = pl.pallas_call(
        kernel,
        out_shape=jax.ShapeDtypeStruct((T, E), jnp.float32),
        in_specs=[vmem] * 9,
        out_specs=vmem,
    )(x2d, prep["w_qkv6"], prep["w_o"], prep["cos"], prep["sin"],
      prep["kb_k_bd"], prep["kb_v_bd"], prep["head_mask"], prep["bias_self"])
    return out2d.reshape(B, S, E)


# ----------------------------- one-time host-side prep -----------------------------
def build_rotate_half_matrix():
    # rotate_half as a right-multiplied (E, E) matrix acting per head block:
    #   out[:, i]      = -x[:, i + D/2]
    #   out[:, i+D/2]  =  x[:, i]
    R = np.zeros((HIDDEN, HIDDEN), np.float32)
    half = HEAD_DIM // 2
    for h in range(NUM_HEADS):
        base = h * HEAD_DIM
        for i in range(half):
            R[base + half + i, base + i] = -1.0
            R[base + i, base + half + i] = 1.0
    return R


def prepare_inputs(params, kb_keys_flat, kb_values_flat, seq_len, batch):
    H, D, E = NUM_HEADS, HEAD_DIM, HIDDEN
    T = batch * seq_len
    scale = 1.0 / math.sqrt(D)

    # --- fused projection weight [Wq | Wq2 | Wk | Wv | Wq@R | Wk@R], pre-transposed;
    #     1/sqrt(D) folded into the query streams, rotate_half folded via R. ---
    R = build_rotate_half_matrix()
    wq = np.asarray(params["q_proj"], np.float32).T
    wq2 = np.asarray(params["q_proj_new"], np.float32).T
    wk = np.asarray(params["k_proj"], np.float32).T
    wv = np.asarray(params["v_proj"], np.float32).T
    wo = np.asarray(params["o_proj"], np.float32).T
    w_qkv6 = np.concatenate(
        [wq * scale, wq2 * scale, wk, wv, (wq @ R) * scale, wk @ R], axis=1)   # (E, 6E)

    # --- RoPE tables pre-tiled to (B*S, E): row r -> position r % S, same table per head ---
    inv_freq = 1.0 / (ROPE_THETA ** (np.arange(0, D, 2, dtype=np.float32) / D))
    t = np.arange(seq_len, dtype=np.float32)
    emb = np.concatenate([np.outer(t, inv_freq)] * 2, axis=-1)                 # (S, D)
    cos = np.tile(np.tile(np.cos(emb), (1, H)), (batch, 1))                    # (T, E)
    sin = np.tile(np.tile(np.sin(emb), (1, H)), (batch, 1))

    # --- this layer's KB slice (len(kb_keys.shape) == 2 branch of the torch module) ---
    kb_idx = LAYER_IDX // KB_LAYER_FREQUENCY
    n_slots = 1 + NUM_HIDDEN_LAYERS // KB_LAYER_FREQUENCY
    kb_len = kb_keys_flat.shape[0]
    kbk = np.asarray(kb_keys_flat, np.float32).reshape(kb_len, n_slots, -1)[:, kb_idx]
    kbv = np.asarray(kb_values_flat, np.float32).reshape(kb_len, n_slots, -1)[:, kb_idx]

    # --- block-diagonal (head-batched) KB key/value matrices and the head mask used to
    #     build the block-diagonal self key/value matrices in-kernel ---
    head_of_col = np.arange(E) // D
    hm_kb = (np.repeat(np.arange(H), kb_len)[:, None] == head_of_col[None, :]).astype(np.float32)
    hm_self = (np.repeat(np.arange(H), T)[:, None] == head_of_col[None, :]).astype(np.float32)
    kb_k_bd = np.tile(kbk, (H, 1)) * hm_kb                                     # (H*kb_len, E)
    kb_v_bd = np.tile(kbv, (H, 1)) * hm_kb

    # --- combined additive bias for self logits: causal within a batch, -inf across
    #     batches; head-independent -> tiled along the head-blocked lane axis ---
    r = np.arange(T)
    c = np.arange(T)
    same_batch = (r[:, None] // seq_len) == (c[None, :] // seq_len)
    causal = (c[None, :] % seq_len) <= (r[:, None] % seq_len)
    bias_tt = np.where(same_batch & causal, 0.0, MASK_MIN).astype(np.float32)  # (T, T)
    bias_self = np.tile(bias_tt, (1, H))                                       # (T, H*T)

    kb_offset = 0.0
    if SEP_QUERY_HEAD and KB_SCALE_FACTOR is not None:
        kb_offset = float(-math.log(kb_len) + math.log(KB_SCALE_FACTOR))

    return dict(
        w_qkv6=jnp.asarray(w_qkv6, jnp.bfloat16),
        w_o=jnp.asarray(wo, jnp.bfloat16),
        cos=jnp.asarray(cos, jnp.float32),
        sin=jnp.asarray(sin, jnp.float32),
        kb_k_bd=jnp.asarray(kb_k_bd, jnp.bfloat16),
        kb_v_bd=jnp.asarray(kb_v_bd, jnp.bfloat16),
        head_mask=jnp.asarray(hm_self, jnp.bfloat16),
        bias_self=jnp.asarray(bias_self, jnp.float32),
        kb_offset=kb_offset,
    )


# ----------------------------- pure-JAX f32 reference -----------------------------
def rope_cos_sin(seq_len, dim, theta):
    inv_freq = 1.0 / (theta ** (jnp.arange(0, dim, 2, dtype=jnp.float32) / dim))
    t = jnp.arange(seq_len, dtype=jnp.float32)
    freqs = jnp.einsum("i,j->ij", t, inv_freq)
    emb = jnp.concatenate([freqs, freqs], axis=-1)
    return jnp.cos(emb), jnp.sin(emb)


def rotate_half(x):
    d = x.shape[-1] // 2
    return jnp.concatenate([-x[..., d:], x[..., :d]], axis=-1)


def apply_rope(q, k, cos, sin):
    cos = cos[None, None]
    sin = sin[None, None]
    return q * cos + rotate_half(q) * sin, k * cos + rotate_half(k) * sin


def prepare_kb_ref(kb_keys_flat, kb_values_flat, bsz):
    kb_idx = LAYER_IDX // KB_LAYER_FREQUENCY
    n_slots = 1 + NUM_HIDDEN_LAYERS // KB_LAYER_FREQUENCY
    kb_len = kb_keys_flat.shape[0]
    kb_k = kb_keys_flat.reshape(kb_len, n_slots, -1)[:, kb_idx]
    kb_v = kb_values_flat.reshape(kb_len, n_slots, -1)[:, kb_idx]
    kb_k = kb_k.reshape(kb_len, NUM_HEADS, HEAD_DIM).transpose(1, 0, 2)
    kb_v = kb_v.reshape(kb_len, NUM_HEADS, HEAD_DIM).transpose(1, 0, 2)
    kb_k = jnp.broadcast_to(kb_k[None], (bsz, NUM_HEADS, kb_len, HEAD_DIM))
    kb_v = jnp.broadcast_to(kb_v[None], (bsz, NUM_HEADS, kb_len, HEAD_DIM))
    return kb_k, kb_v, kb_len


def build_masks_ref(bsz, q_len, kb_len):
    causal = jnp.where(jnp.arange(q_len)[:, None] >= jnp.arange(q_len)[None, :],
                       0.0, MASK_MIN).astype(jnp.float32)
    attention_mask = jnp.broadcast_to(causal[None, None], (bsz, 1, q_len, q_len))
    padding_mask = jnp.all(attention_mask < 0, axis=-1, keepdims=True)
    kb_mask = jnp.where(padding_mask, MASK_MIN,
                        jnp.zeros((bsz, 1, q_len, kb_len), jnp.float32))
    return jnp.concatenate([kb_mask, attention_mask], axis=-1)


def reference_forward(params, hidden_states, kb_keys_flat, kb_values_flat):
    B, S, E = hidden_states.shape
    H, D = NUM_HEADS, HEAD_DIM
    x = hidden_states.astype(jnp.float32)

    def lin(x_, w):
        return jnp.einsum("bse,oe->bso", x_, w)

    q = lin(x, params["q_proj"]).reshape(B, S, H, D).transpose(0, 2, 1, 3)
    q2 = lin(x, params["q_proj_new"]).reshape(B, S, H, D).transpose(0, 2, 1, 3)
    k = lin(x, params["k_proj"]).reshape(B, S, NUM_KV_HEADS, D).transpose(0, 2, 1, 3)
    v = lin(x, params["v_proj"]).reshape(B, S, NUM_KV_HEADS, D).transpose(0, 2, 1, 3)

    cos, sin = rope_cos_sin(S, D, ROPE_THETA)
    q, k = apply_rope(q, k, cos, sin)

    kb_k, kb_v, kb_len = prepare_kb_ref(kb_keys_flat, kb_values_flat, B)
    key_states = jnp.concatenate([kb_k, k], axis=2)
    value_states = jnp.concatenate([kb_v, v], axis=2)
    full_mask = build_masks_ref(B, S, kb_len)

    scale = 1.0 / math.sqrt(D)
    aw = jnp.einsum("bhsd,bhtd->bhst", q, key_states) * scale
    if SEP_QUERY_HEAD:
        aw2 = jnp.einsum("bhsd,bhkd->bhsk", q2, kb_k) * scale
        if KB_SCALE_FACTOR is not None:
            aw2 = aw2 - np.log(kb_len) + np.log(KB_SCALE_FACTOR)
        aw = jnp.concatenate([aw2, aw[..., kb_len:]], axis=-1)
    aw = aw + full_mask
    aw = jax.nn.softmax(aw.astype(jnp.float32), axis=-1)
    attn_out = jnp.einsum("bhst,bhtd->bhsd", aw, value_states)
    attn_out = attn_out.transpose(0, 2, 1, 3).reshape(B, S, E)
    return lin(attn_out, params["o_proj"])


# ----------------------------- main -----------------------------
def init_params(key):
    ks = jax.random.split(key, 6)
    scale = 0.1
    shp = (HIDDEN, HIDDEN)  # torch nn.Linear weight layout: (out_features, in_features)
    params = {
        "q_proj": scale * jax.random.normal(ks[0], shp, jnp.float32),
        "q_proj_new": scale * jax.random.normal(ks[1], shp, jnp.float32),
        "k_proj": scale * jax.random.normal(ks[2], shp, jnp.float32),
        "v_proj": scale * jax.random.normal(ks[3], shp, jnp.float32),
        "o_proj": scale * jax.random.normal(ks[4], shp, jnp.float32),
        # score_shift is declared by the module but never used in forward; kept for fidelity.
        "score_shift": jnp.zeros((NUM_HEADS, 1), jnp.float32) - 3.0,
    }
    return params, ks[5]


if __name__ == "__main__":
    key = jax.random.PRNGKey(0)
    params, key = init_params(key)
    k1, k2, k3 = jax.random.split(key, 3)

    hidden_states = jax.random.normal(k1, (BATCH, SEQ, HIDDEN), jnp.float32)
    n_slots = 1 + NUM_HIDDEN_LAYERS // KB_LAYER_FREQUENCY
    kb_keys_flat = 0.5 * jax.random.normal(k2, (KB_LEN, n_slots * HIDDEN), jnp.float32)
    kb_values_flat = 0.5 * jax.random.normal(k3, (KB_LEN, n_slots * HIDDEN), jnp.float32)

    prep = prepare_inputs(params, kb_keys_flat, kb_values_flat, SEQ, BATCH)
    out = jax.block_until_ready(kblam_attention_forward(prep, hidden_states))

    ref = jax.block_until_ready(
        reference_forward(params, hidden_states, kb_keys_flat, kb_values_flat))
    np.testing.assert_allclose(np.asarray(out), np.asarray(ref), rtol=5e-2, atol=5e-2)

    print("KERNEL_OK")
</pallas_src>

<mosaic_0001>
module attributes {stable_mosaic.version = 11 : i64} {
  func.func @_fused_kblam_kernel(%arg0: memref<16x32xbf16, #tpu.memory_space<vmem>>, %arg1: memref<32x192xbf16, #tpu.memory_space<vmem>>, %arg2: memref<32x32xbf16, #tpu.memory_space<vmem>>, %arg3: memref<16x32xf32, #tpu.memory_space<vmem>>, %arg4: memref<16x32xf32, #tpu.memory_space<vmem>>, %arg5: memref<32x32xbf16, #tpu.memory_space<vmem>>, %arg6: memref<32x32xbf16, #tpu.memory_space<vmem>>, %arg7: memref<64x32xbf16, #tpu.memory_space<vmem>>, %arg8: memref<16x64xf32, #tpu.memory_space<vmem>>, %arg9: memref<16x32xf32, #tpu.memory_space<vmem>>) attributes {dimension_semantics = [], scalar_prefetch = 0 : i64, scratch_operands = 0 : i64, tpu.core_type = #tpu.core_type<tc>} {
    %c0 = arith.constant 0 : index
    %c0_0 = arith.constant 0 : index
    %0 = vector.load %arg0[%c0, %c0_0] : memref<16x32xbf16, #tpu.memory_space<vmem>>, vector<16x32xbf16>
    %c0_1 = arith.constant 0 : index
    %c0_2 = arith.constant 0 : index
    %1 = vector.load %arg1[%c0_1, %c0_2] : memref<32x192xbf16, #tpu.memory_space<vmem>>, vector<32x192xbf16>
    %cst = arith.constant dense<0.000000e+00> : vector<16x192xf32>
    %2 = tpu.matmul %0, %1, %cst {dimension_numbers = #tpu.dot_dimension_numbers<[1], [0], [0], [1], [0, 0, 1, 1], [], []>} : vector<16x32xbf16>, vector<32x192xbf16>, vector<16x192xf32> -> vector<16x192xf32>
    %3 = vector.extract_strided_slice %2 {offsets = [0, 0], sizes = [16, 32], strides = [1, 1]} : vector<16x192xf32> to vector<16x32xf32>
    %4 = vector.extract_strided_slice %2 {offsets = [0, 32], sizes = [16, 32], strides = [1, 1]} : vector<16x192xf32> to vector<16x32xf32>
    %5 = vector.extract_strided_slice %2 {offsets = [0, 64], sizes = [16, 32], strides = [1, 1]} : vector<16x192xf32> to vector<16x32xf32>
    %6 = vector.extract_strided_slice %2 {offsets = [0, 96], sizes = [16, 32], strides = [1, 1]} : vector<16x192xf32> to vector<16x32xf32>
    %7 = vector.extract_strided_slice %2 {offsets = [0, 128], sizes = [16, 32], strides = [1, 1]} : vector<16x192xf32> to vector<16x32xf32>
    %8 = vector.extract_strided_slice %2 {offsets = [0, 160], sizes = [16, 32], strides = [1, 1]} : vector<16x192xf32> to vector<16x32xf32>
    %c0_3 = arith.constant 0 : index
    %c0_4 = arith.constant 0 : index
    %9 = vector.load %arg3[%c0_3, %c0_4] : memref<16x32xf32, #tpu.memory_space<vmem>>, vector<16x32xf32>
    %c0_5 = arith.constant 0 : index
    %c0_6 = arith.constant 0 : index
    %10 = vector.load %arg4[%c0_5, %c0_6] : memref<16x32xf32, #tpu.memory_space<vmem>>, vector<16x32xf32>
    %11 = arith.mulf %3, %9 : vector<16x32xf32>
    %12 = arith.mulf %7, %10 : vector<16x32xf32>
    %13 = arith.addf %11, %12 : vector<16x32xf32>
    %14 = arith.mulf %5, %9 : vector<16x32xf32>
    %15 = arith.mulf %8, %10 : vector<16x32xf32>
    %16 = arith.addf %14, %15 : vector<16x32xf32>
    %17 = arith.truncf %13 : vector<16x32xf32> to vector<16x32xbf16>
    %18 = arith.truncf %16 : vector<16x32xf32> to vector<16x32xbf16>
    %19 = arith.truncf %6 : vector<16x32xf32> to vector<16x32xbf16>
    %20 = arith.truncf %4 : vector<16x32xf32> to vector<16x32xbf16>
    %c0_7 = arith.constant 0 : index
    %c0_8 = arith.constant 0 : index
    %21 = vector.load %arg7[%c0_7, %c0_8] : memref<64x32xbf16, #tpu.memory_space<vmem>>, vector<64x32xbf16>
    %22 = tpu.concatenate %18, %18, %18, %18 in 0 : vector<16x32xbf16>, vector<16x32xbf16>, vector<16x32xbf16>, vector<16x32xbf16> -> vector<64x32xbf16>
    %23 = arith.mulf %22, %21 : vector<64x32xbf16>
    %24 = tpu.concatenate %19, %19, %19, %19 in 0 : vector<16x32xbf16>, vector<16x32xbf16>, vector<16x32xbf16>, vector<16x32xbf16> -> vector<64x32xbf16>
    %25 = arith.mulf %24, %21 : vector<64x32xbf16>
    %c0_9 = arith.constant 0 : index
    %c0_10 = arith.constant 0 : index
    %26 = vector.load %arg5[%c0_9, %c0_10] : memref<32x32xbf16, #tpu.memory_space<vmem>>, vector<32x32xbf16>
    %cst_11 = arith.constant dense<0.000000e+00> : vector<16x32xf32>
    %27 = tpu.matmul %20, %26, %cst_11 {dimension_numbers = #tpu.dot_dimension_numbers<[1], [1], [0], [0], [0, 0, 1, 0], [], []>} : vector<16x32xbf16>, vector<32x32xbf16>, vector<16x32xf32> -> vector<16x32xf32>
    %cst_12 = arith.constant -0.693147182 : f32
    %28 = vector.broadcast %cst_12 : f32 to vector<16x32xf32>
    %29 = arith.addf %27, %28 : vector<16x32xf32>
    %cst_13 = arith.constant dense<0.000000e+00> : vector<16x64xf32>
    %30 = tpu.matmul %17, %23, %cst_13 {dimension_numbers = #tpu.dot_dimension_numbers<[1], [1], [0], [0], [0, 0, 1, 0], [], []>} : vector<16x32xbf16>, vector<64x32xbf16>, vector<16x64xf32> -> vector<16x64xf32>
    %c0_14 = arith.constant 0 : index
    %c0_15 = arith.constant 0 : index
    %31 = vector.load %arg8[%c0_14, %c0_15] : memref<16x64xf32, #tpu.memory_space<vmem>>, vector<16x64xf32>
    %32 = arith.addf %30, %31 : vector<16x64xf32>
    %33 = vector.extract_strided_slice %29 {offsets = [0, 0], sizes = [16, 8], strides = [1, 1]} : vector<16x32xf32> to vector<16x8xf32>
    %34 = vector.extract_strided_slice %32 {offsets = [0, 0], sizes = [16, 16], strides = [1, 1]} : vector<16x64xf32> to vector<16x16xf32>
    %cst_16 = arith.constant dense<0xFF800000> : vector<16xf32>
    %35 = vector.multi_reduction <maximumf>, %33, %cst_16 [1] : vector<16x8xf32> to vector<16xf32>
    %36 = vector.shape_cast %35 : vector<16xf32> to vector<16x1xf32>
    %cst_17 = arith.constant dense<0xFF800000> : vector<16xf32>
    %37 = vector.multi_reduction <maximumf>, %34, %cst_17 [1] : vector<16x16xf32> to vector<16xf32>
    %38 = vector.shape_cast %37 : vector<16xf32> to vector<16x1xf32>
    %39 = arith.maximumf %36, %38 : vector<16x1xf32>
    %40 = vector.broadcast %39 : vector<16x1xf32> to vector<16x8xf32>
    %41 = arith.subf %33, %40 : vector<16x8xf32>
    %42 = math.exp %41 : vector<16x8xf32>
    %43 = vector.broadcast %39 : vector<16x1xf32> to vector<16x16xf32>
    %44 = arith.subf %34, %43 : vector<16x16xf32>
    %45 = math.exp %44 : vector<16x16xf32>
    %cst_18 = arith.constant dense<0.000000e+00> : vector<16xf32>
    %46 = vector.multi_reduction <add>, %42, %cst_18 [1] : vector<16x8xf32> to vector<16xf32>
    %47 = vector.shape_cast %46 : vector<16xf32> to vector<16x1xf32>
    %cst_19 = arith.constant dense<0.000000e+00> : vector<16xf32>
    %48 = vector.multi_reduction <add>, %45, %cst_19 [1] : vector<16x16xf32> to vector<16xf32>
    %49 = vector.shape_cast %48 : vector<16xf32> to vector<16x1xf32>
    %50 = arith.addf %47, %49 : vector<16x1xf32>
    %51 = tpu.reciprocal %50 {approx = true} : vector<16x1xf32> -> vector<16x1xf32>
    %52 = vector.broadcast %51 : vector<16x1xf32> to vector<16x8xf32>
    %53 = arith.mulf %42, %52 : vector<16x8xf32>
    %54 = arith.truncf %53 : vector<16x8xf32> to vector<16x8xbf16>
    %55 = vector.broadcast %51 : vector<16x1xf32> to vector<16x16xf32>
    %56 = arith.mulf %45, %55 : vector<16x16xf32>
    %57 = arith.truncf %56 : vector<16x16xf32> to vector<16x16xbf16>
    %58 = vector.extract_strided_slice %29 {offsets = [0, 8], sizes = [16, 8], strides = [1, 1]} : vector<16x32xf32> to vector<16x8xf32>
    %59 = vector.extract_strided_slice %32 {offsets = [0, 16], sizes = [16, 16], strides = [1, 1]} : vector<16x64xf32> to vector<16x16xf32>
    %cst_20 = arith.constant dense<0xFF800000> : vector<16xf32>
    %60 = vector.multi_reduction <maximumf>, %58, %cst_20 [1] : vector<16x8xf32> to vector<16xf32>
    %61 = vector.shape_cast %60 : vector<16xf32> to vector<16x1xf32>
    %cst_21 = arith.constant dense<0xFF800000> : vector<16xf32>
    %62 = vector.multi_reduction <maximumf>, %59, %cst_21 [1] : vector<16x16xf32> to vector<16xf32>
    %63 = vector.shape_cast %62 : vector<16xf32> to vector<16x1xf32>
    %64 = arith.maximumf %61, %63 : vector<16x1xf32>
    %65 = vector.broadcast %64 : vector<16x1xf32> to vector<16x8xf32>
    %66 = arith.subf %58, %65 : vector<16x8xf32>
    %67 = math.exp %66 : vector<16x8xf32>
    %68 = vector.broadcast %64 : vector<16x1xf32> to vector<16x16xf32>
    %69 = arith.subf %59, %68 : vector<16x16xf32>
    %70 = math.exp %69 : vector<16x16xf32>
    %cst_22 = arith.constant dense<0.000000e+00> : vector<16xf32>
    %71 = vector.multi_reduction <add>, %67, %cst_22 [1] : vector<16x8xf32> to vector<16xf32>
    %72 = vector.shape_cast %71 : vector<16xf32> to vector<16x1xf32>
    %cst_23 = arith.constant dense<0.000000e+00> : vector<16xf32>
    %73 = vector.multi_reduction <add>, %70, %cst_23 [1] : vector<16x16xf32> to vector<16xf32>
    %74 = vector.shape_cast %73 : vector<16xf32> to vector<16x1xf32>
    %75 = arith.addf %72, %74 : vector<16x1xf32>
    %76 = tpu.reciprocal %75 {approx = true} : vector<16x1xf32> -> vector<16x1xf32>
    %77 = vector.broadcast %76 : vector<16x1xf32> to vector<16x8xf32>
    %78 = arith.mulf %67, %77 : vector<16x8xf32>
    %79 = arith.truncf %78 : vector<16x8xf32> to vector<16x8xbf16>
    %80 = vector.broadcast %76 : vector<16x1xf32> to vector<16x16xf32>
    %81 = arith.mulf %70, %80 : vector<16x16xf32>
    %82 = arith.truncf %81 : vector<16x16xf32> to vector<16x16xbf16>
    %83 = vector.extract_strided_slice %29 {offsets = [0, 16], sizes = [16, 8], strides = [1, 1]} : vector<16x32xf32> to vector<16x8xf32>
    %84 = vector.extract_strided_slice %32 {offsets = [0, 32], sizes = [16, 16], strides = [1, 1]} : vector<16x64xf32> to vector<16x16xf32>
    %cst_24 = arith.constant dense<0xFF800000> : vector<16xf32>
    %85 = vector.multi_reduction <maximumf>, %83, %cst_24 [1] : vector<16x8xf32> to vector<16xf32>
    %86 = vector.shape_cast %85 : vector<16xf32> to vector<16x1xf32>
    %cst_25 = arith.constant dense<0xFF800000> : vector<16xf32>
    %87 = vector.multi_reduction <maximumf>, %84, %cst_25 [1] : vector<16x16xf32> to vector<16xf32>
    %88 = vector.shape_cast %87 : vector<16xf32> to vector<16x1xf32>
    %89 = arith.maximumf %86, %88 : vector<16x1xf32>
    %90 = vector.broadcast %89 : vector<16x1xf32> to vector<16x8xf32>
    %91 = arith.subf %83, %90 : vector<16x8xf32>
    %92 = math.exp %91 : vector<16x8xf32>
    %93 = vector.broadcast %89 : vector<16x1xf32> to vector<16x16xf32>
    %94 = arith.subf %84, %93 : vector<16x16xf32>
    %95 = math.exp %94 : vector<16x16xf32>
    %cst_26 = arith.constant dense<0.000000e+00> : vector<16xf32>
    %96 = vector.multi_reduction <add>, %92, %cst_26 [1] : vector<16x8xf32> to vector<16xf32>
    %97 = vector.shape_cast %96 : vector<16xf32> to vector<16x1xf32>
    %cst_27 = arith.constant dense<0.000000e+00> : vector<16xf32>
    %98 = vector.multi_reduction <add>, %95, %cst_27 [1] : vector<16x16xf32> to vector<16xf32>
    %99 = vector.shape_cast %98 : vector<16xf32> to vector<16x1xf32>
    %100 = arith.addf %97, %99 : vector<16x1xf32>
    %101 = tpu.reciprocal %100 {approx = true} : vector<16x1xf32> -> vector<16x1xf32>
    %102 = vector.broadcast %101 : vector<16x1xf32> to vector<16x8xf32>
    %103 = arith.mulf %92, %102 : vector<16x8xf32>
    %104 = arith.truncf %103 : vector<16x8xf32> to vector<16x8xbf16>
    %105 = vector.broadcast %101 : vector<16x1xf32> to vector<16x16xf32>
    %106 = arith.mulf %95, %105 : vector<16x16xf32>
    %107 = arith.truncf %106 : vector<16x16xf32> to vector<16x16xbf16>
    %108 = vector.extract_strided_slice %29 {offsets = [0, 24], sizes = [16, 8], strides = [1, 1]} : vector<16x32xf32> to vector<16x8xf32>
    %109 = vector.extract_strided_slice %32 {offsets = [0, 48], sizes = [16, 16], strides = [1, 1]} : vector<16x64xf32> to vector<16x16xf32>
    %cst_28 = arith.constant dense<0xFF800000> : vector<16xf32>
    %110 = vector.multi_reduction <maximumf>, %108, %cst_28 [1] : vector<16x8xf32> to vector<16xf32>
    %111 = vector.shape_cast %110 : vector<16xf32> to vector<16x1xf32>
    %cst_29 = arith.constant dense<0xFF800000> : vector<16xf32>
    %112 = vector.multi_reduction <maximumf>, %109, %cst_29 [1] : vector<16x16xf32> to vector<16xf32>
    %113 = vector.shape_cast %112 : vector<16xf32> to vector<16x1xf32>
    %114 = arith.maximumf %111, %113 : vector<16x1xf32>
    %115 = vector.broadcast %114 : vector<16x1xf32> to vector<16x8xf32>
    %116 = arith.subf %108, %115 : vector<16x8xf32>
    %117 = math.exp %116 : vector<16x8xf32>
    %118 = vector.broadcast %114 : vector<16x1xf32> to vector<16x16xf32>
    %119 = arith.subf %109, %118 : vector<16x16xf32>
    %120 = math.exp %119 : vector<16x16xf32>
    %cst_30 = arith.constant dense<0.000000e+00> : vector<16xf32>
    %121 = vector.multi_reduction <add>, %117, %cst_30 [1] : vector<16x8xf32> to vector<16xf32>
    %122 = vector.shape_cast %121 : vector<16xf32> to vector<16x1xf32>
    %cst_31 = arith.constant dense<0.000000e+00> : vector<16xf32>
    %123 = vector.multi_reduction <add>, %120, %cst_31 [1] : vector<16x16xf32> to vector<16xf32>
    %124 = vector.shape_cast %123 : vector<16xf32> to vector<16x1xf32>
    %125 = arith.addf %122, %124 : vector<16x1xf32>
    %126 = tpu.reciprocal %125 {approx = true} : vector<16x1xf32> -> vector<16x1xf32>
    %127 = vector.broadcast %126 : vector<16x1xf32> to vector<16x8xf32>
    %128 = arith.mulf %117, %127 : vector<16x8xf32>
    %129 = arith.truncf %128 : vector<16x8xf32> to vector<16x8xbf16>
    %130 = vector.broadcast %126 : vector<16x1xf32> to vector<16x16xf32>
    %131 = arith.mulf %120, %130 : vector<16x16xf32>
    %132 = arith.truncf %131 : vector<16x16xf32> to vector<16x16xbf16>
    %133 = tpu.concatenate %54, %79, %104, %129 in 1 : vector<16x8xbf16>, vector<16x8xbf16>, vector<16x8xbf16>, vector<16x8xbf16> -> vector<16x32xbf16>
    %134 = tpu.concatenate %57, %82, %107, %132 in 1 : vector<16x16xbf16>, vector<16x16xbf16>, vector<16x16xbf16>, vector<16x16xbf16> -> vector<16x64xbf16>
    %c0_32 = arith.constant 0 : index
    %c0_33 = arith.constant 0 : index
    %135 = vector.load %arg6[%c0_32, %c0_33] : memref<32x32xbf16, #tpu.memory_space<vmem>>, vector<32x32xbf16>
    %cst_34 = arith.constant dense<0.000000e+00> : vector<16x32xf32>
    %136 = tpu.matmul %133, %135, %cst_34 {dimension_numbers = #tpu.dot_dimension_numbers<[1], [0], [0], [1], [0, 0, 1, 1], [], []>} : vector<16x32xbf16>, vector<32x32xbf16>, vector<16x32xf32> -> vector<16x32xf32>
    %cst_35 = arith.constant dense<0.000000e+00> : vector<16x32xf32>
    %137 = tpu.matmul %134, %25, %cst_35 {dimension_numbers = #tpu.dot_dimension_numbers<[1], [0], [0], [1], [0, 0, 1, 1], [], []>} : vector<16x64xbf16>, vector<64x32xbf16>, vector<16x32xf32> -> vector<16x32xf32>
    %138 = arith.addf %136, %137 : vector<16x32xf32>
    %139 = arith.truncf %138 : vector<16x32xf32> to vector<16x32xbf16>
    %c0_36 = arith.constant 0 : index
    %c0_37 = arith.constant 0 : index
    %140 = vector.load %arg2[%c0_36, %c0_37] : memref<32x32xbf16, #tpu.memory_space<vmem>>, vector<32x32xbf16>
    %cst_38 = arith.constant dense<0.000000e+00> : vector<16x32xf32>
    %141 = tpu.matmul %139, %140, %cst_38 {dimension_numbers = #tpu.dot_dimension_numbers<[1], [0], [0], [1], [0, 0, 1, 1], [], []>} : vector<16x32xbf16>, vector<32x32xbf16>, vector<16x32xf32> -> vector<16x32xf32>
    %c0_39 = arith.constant 0 : index
    %c0_40 = arith.constant 0 : index
    %142 = vector.load %arg9[%c0_39, %c0_40] : memref<16x32xf32, #tpu.memory_space<vmem>>, vector<16x32xf32>
    tpu.vector_store %arg9[%c0_39, %c0_40], %141 {strides = array<i32>} : memref<16x32xf32, #tpu.memory_space<vmem>>, vector<16x32xf32>,
    return
  }
}

</mosaic_0001>

<llo_original>
// kernel: tpu_custom_call.1
$region0: #{tpu_custom_call.1}
  #allocation0 [shape = 'u32[]', space=smem, size = 0x4, offset = 0x4, fixed_abs, tag = 'smem constant byte address 0x4 - core index']
  #allocation1 [shape = 'u32[144,128]{1,0:T(1,128)}', space=vmem, size = 0x12000, scoped, tag = 'internal scratch']
  %s0 = inlined_call_operand.hbm [shape: bf16[16,32], index: 0, kind: input, shape index: {}]
  %s1 = inlined_call_operand.vmem [shape: bf16[32,192], index: 1, kind: input, shape index: {}]
  %s2 = inlined_call_operand.vmem [shape: bf16[32,32], index: 2, kind: input, shape index: {}]
  %s3 = inlined_call_operand.hbm [shape: f32[16,32], index: 3, kind: input, shape index: {}]
  %s4 = inlined_call_operand.hbm [shape: f32[16,32], index: 4, kind: input, shape index: {}]
  %s5 = inlined_call_operand.hbm [shape: bf16[32,32], index: 5, kind: input, shape index: {}]
  %s6 = inlined_call_operand.hbm [shape: bf16[32,32], index: 6, kind: input, shape index: {}]
  %s7 = inlined_call_operand.vmem [shape: bf16[64,32], index: 7, kind: input, shape index: {}]
  %s8 = inlined_call_operand.hbm [shape: f32[16,64], index: 8, kind: input, shape index: {}]
  %s9 = inlined_call_operand.hbm [shape: f32[16,32], index: 9, kind: output, shape index: {}]
  %s10 = sld [smem:[#allocation0]]
  $region70: #{tpu_custom_call.1} parent=0
    _
  %s12 = ssub.s32 1, %s10
  %s13 = scalar_select 0, %s12, %s10
  $region1: #{tpu_custom_call.1} parent=0
    #allocation2 [shape = 'u8[4096]{0}', space=vmem, size = 0x1000, scoped, tag = 'input window, operand 0, single buffered']
    #allocation3 [shape = 's32[1]{0}', space=sflag, size = 0x4, scoped, tag = 'scoped memory for tpu_custom_call.1']
    #allocation4 [shape = 's32[1]{0}', space=sflag, size = 0x4, scoped, tag = 'scoped memory for tpu_custom_call.1']
    #allocation5 [shape = 'u8[8192]{0}', space=vmem, size = 0x2000, scoped, tag = 'input window, operand 3, single buffered']
    #allocation6 [shape = 's32[1]{0}', space=sflag, size = 0x4, scoped, tag = 'scoped memory for tpu_custom_call.1']
    #allocation7 [shape = 'u8[8192]{0}', space=vmem, size = 0x2000, scoped, tag = 'input window, operand 4, single buffered']
    #allocation8 [shape = 'u8[8192]{0}', space=vmem, size = 0x2000, scoped, tag = 'input window, operand 5, single buffered']
    #allocation9 [shape = 's32[1]{0}', space=sflag, size = 0x4, scoped, tag = 'scoped memory for tpu_custom_call.1']
    #allocation10 [shape = 'u8[8192]{0}', space=vmem, size = 0x2000, scoped, tag = 'input window, operand 6, single buffered']
    #allocation11 [shape = 'u8[8192]{0}', space=vmem, size = 0x2000, scoped, tag = 'input window, operand 8, single buffered']
    #allocation12 [shape = 's32[1]{0}', space=sflag, size = 0x4, scoped, tag = 'scoped memory for tpu_custom_call.1']
    #allocation13 [shape = 'u8[8192]{0}', space=vmem, size = 0x2000, scoped, tag = 'output window, operand 0, single buffered']
    %14 = vsyncpa [#allocation3], 0
    %15 = vsyncpa [#allocation6], 0
    %16 = vsyncpa [#allocation9], 0
    %17 = vsyncpa [#allocation12], 0
    %18 = vsyncpa [#allocation4], 0
    // Predicated region
    $region2: #{tpu_custom_call.1} parent=1 // pred_check
      _
    $region3: #{tpu_custom_call.1} parent=1 // pred_check_branch
      %20 = sbr.rel (0) target = $region5
    $region4: #{tpu_custom_call.1} parent=1 // pred_region
      %s22 = ssub.s32 128, 128
      %23 = vsyncadd [#allocation3], %s22
      %s24 = sshll.u32 [#allocation2], 4
      %s25 = int_to_ptr.vmem [resolvable:$true] %s24
      %30 = dma.hbm_to_vmem [thread:$0]  %s0, 128, %s25, [#allocation3], 64, 64, 4
    $region5: #{tpu_custom_call.1} parent=1 // pred_fallthru
      _
    // Predicated region
    $region6: #{tpu_custom_call.1} parent=1 // pred_check
      _
    $region7: #{tpu_custom_call.1} parent=1 // pred_check_branch
      %32 = sbr.rel (0) target = $region9
    $region8: #{tpu_custom_call.1} parent=1 // pred_region
      _
    $region9: #{tpu_custom_call.1} parent=1 // pred_fallthru
      _
    // Predicated region
    $region10: #{tpu_custom_call.1} parent=1 // pred_check
      _
    $region11: #{tpu_custom_call.1} parent=1 // pred_check_branch
      %34 = sbr.rel (0) target = $region13
    $region12: #{tpu_custom_call.1} parent=1 // pred_region
      _
    $region13: #{tpu_custom_call.1} parent=1 // pred_fallthru
      _
    // Predicated region
    $region14: #{tpu_custom_call.1} parent=1 // pred_check
      _
    $region15: #{tpu_custom_call.1} parent=1 // pred_check_branch
      %36 = sbr.rel (0) target = $region17
    $region16: #{tpu_custom_call.1} parent=1 // pred_region
      %s38 = ssub.s32 256, 256
      %39 = vsyncadd [#allocation6], %s38
      %s40 = sshll.u32 [#allocation5], 4
      %s41 = int_to_ptr.vmem [resolvable:$true] %s40
      %46 = dma.hbm_to_vmem [thread:$0]  %s3, 256, %s41, [#allocation6], 128, 128, 8
    $region17: #{tpu_custom_call.1} parent=1 // pred_fallthru
      _
    // Predicated region
    $region18: #{tpu_custom_call.1} parent=1 // pred_check
      _
    $region19: #{tpu_custom_call.1} parent=1 // pred_check_branch
      %48 = sbr.rel (0) target = $region21
    $region20: #{tpu_custom_call.1} parent=1 // pred_region
      %s50 = ssub.s32 256, 256
      %51 = vsyncadd [#allocation6], %s50
      %s52 = sshll.u32 [#allocation7], 4
      %s53 = int_to_ptr.vmem [resolvable:$true] %s52
      %58 = dma.hbm_to_vmem [thread:$0]  %s4, 256, %s53, [#allocation6], 128, 128, 8
    $region21: #{tpu_custom_call.1} parent=1 // pred_fallthru
      _
    // Predicated region
    $region22: #{tpu_custom_call.1} parent=1 // pred_check
      _
    $region23: #{tpu_custom_call.1} parent=1 // pred_check_branch
      %60 = sbr.rel (0) target = $region25
    $region24: #{tpu_custom_call.1} parent=1 // pred_region
      %s62 = ssub.s32 256, 256
      %63 = vsyncadd [#allocation9], %s62
      %s64 = sshll.u32 [#allocation8], 4
      %s65 = int_to_ptr.vmem [resolvable:$true] %s64
      %70 = dma.hbm_to_vmem [thread:$0]  %s5, 256, %s65, [#allocation9], 64, 64, 4
    $region25: #{tpu_custom_call.1} parent=1 // pred_fallthru
      _
    // Predicated region
    $region26: #{tpu_custom_call.1} parent=1 // pred_check
      _
    $region27: #{tpu_custom_call.1} parent=1 // pred_check_branch
      %72 = sbr.rel (0) target = $region29
    $region28: #{tpu_custom_call.1} parent=1 // pred_region
      %s74 = ssub.s32 256, 256
      %75 = vsyncadd [#allocation9], %s74
      %s76 = sshll.u32 [#allocation10], 4
      %s77 = int_to_ptr.vmem [resolvable:$true] %s76
      %82 = dma.hbm_to_vmem [thread:$0]  %s6, 256, %s77, [#allocation9], 64, 64, 4
    $region29: #{tpu_custom_call.1} parent=1 // pred_fallthru
      _
    // Predicated region
    $region30: #{tpu_custom_call.1} parent=1 // pred_check
      _
    $region31: #{tpu_custom_call.1} parent=1 // pred_check_branch
      %84 = sbr.rel (0) target = $region33
    $region32: #{tpu_custom_call.1} parent=1 // pred_region
      _
    $region33: #{tpu_custom_call.1} parent=1 // pred_fallthru
      _
    // Predicated region
    $region34: #{tpu_custom_call.1} parent=1 // pred_check
      _
    $region35: #{tpu_custom_call.1} parent=1 // pred_check_branch
      %86 = sbr.rel (0) target = $region37
    $region36: #{tpu_custom_call.1} parent=1 // pred_region
      %s88 = ssub.s32 256, 256
      %89 = vsyncadd [#allocation12], %s88
      %s90 = sshll.u32 [#allocation11], 4
      %s91 = int_to_ptr.vmem [resolvable:$true] %s90
      %96 = dma.hbm_to_vmem [thread:$0]  %s8, 256, %s91, [#allocation12], 128, 128, 8
    $region37: #{tpu_custom_call.1} parent=1 // pred_fallthru
      _
    // Predicated region
    $region38: #{tpu_custom_call.1} parent=1 // pred_check
      _
    $region39: #{tpu_custom_call.1} parent=1 // pred_check_branch
      %98 = sbr.rel (0) target = $region41
    $region40: #{tpu_custom_call.1} parent=1 // pred_region
      %99 = dma.done [#allocation3], 128
    $region41: #{tpu_custom_call.1} parent=1 // pred_fallthru
      _
    // Predicated region
    $region42: #{tpu_custom_call.1} parent=1 // pred_check
      _
    $region43: #{tpu_custom_call.1} parent=1 // pred_check_branch
      %101 = sbr.rel (0) target = $region45
    $region44: #{tpu_custom_call.1} parent=1 // pred_region
      %102 = dma.done [#allocation6], 256
    $region45: #{tpu_custom_call.1} parent=1 // pred_fallthru
      _
    // Predicated region
    $region46: #{tpu_custom_call.1} parent=1 // pred_check
      _
    $region47: #{tpu_custom_call.1} parent=1 // pred_check_branch
      %104 = sbr.rel (0) target = $region49
    $region48: #{tpu_custom_call.1} parent=1 // pred_region
      %105 = dma.done [#allocation6], 256
    $region49: #{tpu_custom_call.1} parent=1 // pred_fallthru
      _
    // Predicated region
    $region50: #{tpu_custom_call.1} parent=1 // pred_check
      _
    $region51: #{tpu_custom_call.1} parent=1 // pred_check_branch
      %107 = sbr.rel (0) target = $region53
    $region52: #{tpu_custom_call.1} parent=1 // pred_region
      %108 = dma.done [#allocation9], 256
    $region53: #{tpu_custom_call.1} parent=1 // pred_fallthru
      _
    // Predicated region
    $region54: #{tpu_custom_call.1} parent=1 // pred_check
      _
    $region55: #{tpu_custom_call.1} parent=1 // pred_check_branch
      %110 = sbr.rel (0) target = $region57
    $region56: #{tpu_custom_call.1} parent=1 // pred_region
      %111 = dma.done [#allocation9], 256
    $region57: #{tpu_custom_call.1} parent=1 // pred_fallthru
      _
    // Predicated region
    $region58: #{tpu_custom_call.1} parent=1 // pred_check
      _
    $region59: #{tpu_custom_call.1} parent=1 // pred_check_branch
      %113 = sbr.rel (0) target = $region61
    $region60: #{tpu_custom_call.1} parent=1 // pred_region
      %114 = dma.done [#allocation12], 256
    $region61: #{tpu_custom_call.1} parent=1 // pred_fallthru
      _
    %v116 = vld [vmem:[#allocation2] sm:$0xf]
    %v117 = vld [vmem:[#allocation2 + $0x4] sm:$0xf]
    %v118 = vld [vmem:[%s1] sm:$0xff]
    %v119 = vld [vmem:[%s1 + $0x8] sm:$0xff]
    %v120 = vld [vmem:[%s1 + $0x10] sm:$0xff]
    %v121 = vld [vmem:[%s1 + $0x18] sm:$0xff]
    %v124 = vunpack.c.l.b16 %v116
    %v125 = vunpack.c.l.b16 %v117
    %v126 = vpack.c.b16 %v125, %v124
    %v131 = vunpack.c.l.b16 %v118
    %v132 = vunpack.c.h.b16 %v118
    %v133 = vunpack.c.l.b16 %v119
    %v134 = vunpack.c.h.b16 %v119
    %v135 = vunpack.c.l.b16 %v120
    %v136 = vunpack.c.h.b16 %v120
    %v137 = vunpack.c.l.b16 %v121
    %v138 = vunpack.c.h.b16 %v121
    %v139 = vpack.c.b16 %v133, %v131
    %v140 = vpack.c.b16 %v134, %v132
    %v141 = vpack.c.b16 %v137, %v135
    %v142 = vpack.c.b16 %v138, %v136
    %vm147 = vcmask 261120
    %v149 = vsel %vm147, %v126, 0
    %151 = vmatprep.subr.bf16.mxu0 %v140
    %152 = vmatpush1.bf16.msra.mxu0 %v139
    %153 = vmatprep.subr.bf16.mxu0 %v142
    %154 = vmatpush1.bf16.msra.mxu0 %v141
    %155 = vmatprep.subr.bf16.mxu0 0
    %156 = vmatpush1.bf16.msra.mxu0 0
    %157 = vmatprep.subr.bf16.mxu0 0
    %158 = vmatpush1.bf16.msra.mxu0 0
    %159 = vmatprep.subr.bf16.mxu0 0
    %160 = vmatpush1.bf16.msra.mxu0 0
    %161 = vmatprep.subr.bf16.mxu0 0
    %162 = vmatpush1.bf16.msra.mxu0 0
    %163 = vmatprep.subr.bf16.mxu0 0
    %164 = vmatpush1.bf16.msra.mxu0 0
    %165 = vmatprep.subr.bf16.mxu0 0
    %166 = vmatpush1.bf16.msra.mxu0 0
    %167 = vmatprep.subr.bf16.mxu0 0
    %168 = vmatpush1.bf16.msra.mxu0 0
    %169 = vmatprep.subr.bf16.mxu0 0
    %170 = vmatpush1.bf16.msra.mxu0 0
    %171 = vmatprep.subr.bf16.mxu0 0
    %172 = vmatpush1.bf16.msra.mxu0 0
    %173 = vmatprep.subr.bf16.mxu0 0
    %174 = vmatpush1.bf16.msra.mxu0 0
    %175 = vmatprep.subr.bf16.mxu0 0
    %176 = vmatpush1.bf16.msra.mxu0 0
    %177 = vmatprep.subr.bf16.mxu0 0
    %178 = vmatpush1.bf16.msra.mxu0 0
    %179 = vmatprep.subr.bf16.mxu0 0
    %180 = vmatpush1.bf16.msra.mxu0 0
    %181 = vmatprep.subr.bf16.mxu0 0
    %182 = vmatpush1.bf16.msra.mxu0 0
    %183 = vmatprep.mubr.bf16.mxu0 0
    %184 = vmatmul.mubr.bf16.gmra.mrb[0].mxu0 %v149
    %v185 = vpop.f32.mrb[0].mxu0
    %v186 = vadd.f32 0.0, %v185
    %v187 = vpop.f32.mrb[0].mxu0
    %v188 = vadd.f32 0.0, %v187
    %v189 = vpop.f32.mrb[0].mxu0
    %v190 = vadd.f32 0.0, %v189
    %v191 = vpop.f32.mrb[0].mxu0
    %v192 = vadd.f32 0.0, %v191
    %193 = vdwg.mxu0
    %v194 = vld [vmem:[#allocation5] sm:$0xff]
    %v195 = vld [vmem:[#allocation5 + $0x8] sm:$0xff]
    %v196 = vld [vmem:[#allocation7] sm:$0xff]
    %v197 = vld [vmem:[#allocation7 + $0x8] sm:$0xff]
    %v198 = vmul.f32 %v186, %v194
    %v199 = vmul.f32 %v190, %v195
    %v200 = vmul.f32 %v188, %v196
    %v201 = vmul.f32 %v192, %v197
    %v202 = vadd.f32 %v198, %v200
    %v203 = vadd.f32 %v199, %v201
    %206 = vrot.lane.b32.xlu0 %v194, 64
    %v207 = vpop.permute.xlu0 %206
    %208 = vrot.lane.b32.xlu0 %v195, 64
    %v209 = vpop.permute.xlu0 %208
    %v212 = vmul.f32 %v186, %v207
    %v213 = vmul.f32 %v190, %v209
    %216 = vrot.lane.b32.xlu0 %v196, 32
    %v217 = vpop.permute.xlu0 %216
    %218 = vrot.lane.b32.xlu0 %v197, 32
    %v219 = vpop.permute.xlu0 %218
    %v222 = vmul.f32 %v188, %v217
    %v223 = vmul.f32 %v192, %v219
    %226 = vrot.lane.b32.xlu0 %v222, 32
    %v227 = vpop.permute.xlu0 %226
    %228 = vrot.lane.b32.xlu0 %v223, 32
    %v229 = vpop.permute.xlu0 %228
    %v232 = vadd.f32 %v212, %v227
    %v233 = vadd.f32 %v213, %v229
    %v234 = vpack.c.bf16 %v203, %v202
    %v235 = vpack.c.bf16 %v233, %v232
    %v236 = vpack.c.bf16 %v190, %v186
    %v237 = vld [vmem:[%s7] sm:$0xf]
    %v238 = vld [vmem:[%s7 + $0x4] sm:$0xf]
    %v239 = vld [vmem:[%s7 + $0x8] sm:$0xf]
    %v240 = vld [vmem:[%s7 + $0xc] sm:$0xf]
    %v241 = vld [vmem:[%s7 + $0x10] sm:$0xf]
    %v242 = vld [vmem:[%s7 + $0x14] sm:$0xf]
    %v243 = vld [vmem:[%s7 + $0x18] sm:$0xf]
    %v244 = vld [vmem:[%s7 + $0x1c] sm:$0xf]
    %v253 = vunpack.c.l.b16 %v237
    %v254 = vunpack.c.l.b16 %v238
    %v255 = vunpack.c.l.b16 %v239
    %v256 = vunpack.c.l.b16 %v240
    %v257 = vunpack.c.l.b16 %v241
    %v258 = vunpack.c.l.b16 %v242
    %v259 = vunpack.c.l.b16 %v243
    %v260 = vunpack.c.l.b16 %v244
    %v261 = vpack.c.b16 %v254, %v253
    %v262 = vpack.c.b16 %v256, %v255
    %v263 = vpack.c.b16 %v258, %v257
    %v264 = vpack.c.b16 %v260, %v259
    %265 = vrot.lane.b32.xlu0 %v261, 64
    %v266 = vpop.permute.xlu0 %265
    %267 = vrot.lane.b32.xlu0 %v262, 64
    %v268 = vpop.permute.xlu0 %267
    %269 = vrot.lane.b32.xlu0 %v263, 64
    %v270 = vpop.permute.xlu0 %269
    %271 = vrot.lane.b32.xlu0 %v264, 64
    %v272 = vpop.permute.xlu0 %271
    %v277 = vmul.bf16 %v235, %v266
    %v278 = vmul.bf16 %v235, %v268
    %v279 = vmul.bf16 %v235, %v270
    %v280 = vmul.bf16 %v235, %v272
    %281 = vrot.lane.b32.xlu0 %v261, 96
    %v282 = vpop.permute.xlu0 %281
    %283 = vrot.lane.b32.xlu0 %v262, 96
    %v284 = vpop.permute.xlu0 %283
    %285 = vrot.lane.b32.xlu0 %v263, 96
    %v286 = vpop.permute.xlu0 %285
    %287 = vrot.lane.b32.xlu0 %v264, 96
    %v288 = vpop.permute.xlu0 %287
    %v293 = vmul.bf16 %v236, %v282
    %v294 = vmul.bf16 %v236, %v284
    %v295 = vmul.bf16 %v236, %v286
    %v296 = vmul.bf16 %v236, %v288
    %v297 = vld [vmem:[#allocation8] sm:$0xf]
    %v298 = vld [vmem:[#allocation8 + $0x4] sm:$0xf]
    %v299 = vld [vmem:[#allocation8 + $0x8] sm:$0xf]
    %v300 = vld [vmem:[#allocation8 + $0xc] sm:$0xf]
    %302 = vrot.lane.b32.xlu0 %v236, 96
    %v303 = vpop.permute.xlu0 %302
    %v308 = vunpack.c.l.b16 %v297
    %v309 = vunpack.c.l.b16 %v298
    %v310 = vunpack.c.l.b16 %v299
    %v311 = vunpack.c.l.b16 %v300
    %v312 = vpack.c.b16 %v309, %v308
    %v313 = vpack.c.b16 %v311, %v310
    %v315 = vsel %vm147, %v303, 0
    %v318 = vsel %vm147, %v312, 0
    %v321 = vsel %vm147, %v313, 0
    %323 = vmatprep.subr.bf16.mxu0 0
    %324 = vmatpush1.bf16.xpose.msra.mxu0 %v318
    %325 = vmatprep.subr.bf16.mxu0 0
    %326 = vmatpush1.bf16.xpose.msra.mxu0 %v321
    %327 = vmatprep.subr.bf16.mxu0 0
    %328 = vmatpush1.bf16.xpose.msra.mxu0 0
    %329 = vmatprep.subr.bf16.mxu0 0
    %330 = vmatpush1.bf16.xpose.msra.mxu0 0
    %331 = vmatprep.subr.bf16.mxu0 0
    %332 = vmatpush1.bf16.xpose.msra.mxu0 0
    %333 = vmatprep.subr.bf16.mxu0 0
    %334 = vmatpush1.bf16.xpose.msra.mxu0 0
    %335 = vmatprep.subr.bf16.mxu0 0
    %336 = vmatpush1.bf16.xpose.msra.mxu0 0
    %337 = vmatprep.subr.bf16.mxu0 0
    %338 = vmatpush1.bf16.xpose.msra.mxu0 0
    %339 = vmatprep.subr.bf16.mxu0 0
    %340 = vmatpush1.bf16.xpose.msra.mxu0 0
    %341 = vmatprep.subr.bf16.mxu0 0
    %342 = vmatpush1.bf16.xpose.msra.mxu0 0
    %343 = vmatprep.subr.bf16.mxu0 0
    %344 = vmatpush1.bf16.xpose.msra.mxu0 0
    %345 = vmatprep.subr.bf16.mxu0 0
    %346 = vmatpush1.bf16.xpose.msra.mxu0 0
    %347 = vmatprep.subr.bf16.mxu0 0
    %348 = vmatpush1.bf16.xpose.msra.mxu0 0
    %349 = vmatprep.subr.bf16.mxu0 0
    %350 = vmatpush1.bf16.xpose.msra.mxu0 0
    %351 = vmatprep.subr.bf16.mxu0 0
    %352 = vmatpush1.bf16.xpose.msra.mxu0 0
    %353 = vmatprep.subr.bf16.mxu0 0
    %354 = vmatpush1.bf16.xpose.msra.mxu0 0
    %355 = vmatprep.mubr.bf16.mxu0 0
    %356 = vmatmul.mubr.bf16.gmra.mrb[0].mxu0 %v315
    %v357 = vpop.f32.mrb[0].mxu0
    %v358 = vadd.f32 -0.6931472, %v357
    %v359 = vpop.f32.mrb[0].mxu0
    %v360 = vpop.f32.mrb[0].mxu0
    %v361 = vadd.f32 -0.6931472, %v360
    %v362 = vpop.f32.mrb[0].mxu0
    %363 = vdwg.mxu0
    %v364 = vld [vmem:[#allocation11] sm:$0xff]
    %v365 = vld [vmem:[#allocation11 + $0x8] sm:$0xff]
    %370 = vrot.lane.b32.xlu0 %v277, 64
    %v371 = vpop.permute.xlu0 %370
    %372 = vrot.lane.b32.xlu0 %v278, 64
    %v373 = vpop.permute.xlu0 %372
    %374 = vrot.lane.b32.xlu0 %v279, 64
    %v375 = vpop.permute.xlu0 %374
    %376 = vrot.lane.b32.xlu0 %v280, 64
    %v377 = vpop.permute.xlu0 %376
    %v379 = vsel %vm147, %v234, 0
    %v382 = vsel %vm147, %v371, 0
    %v385 = vsel %vm147, %v373, 0
    %v388 = vsel %vm147, %v375, 0
    %v391 = vsel %vm147, %v377, 0
    %393 = vmatprep.subr.bf16.mxu0 0
    %394 = vmatpush1.bf16.xpose.msra.mxu0 %v382
    %395 = vmatprep.subr.bf16.mxu0 0
    %396 = vmatpush1.bf16.xpose.msra.mxu0 %v385
    %397 = vmatprep.subr.bf16.mxu0 0
    %398 = vmatpush1.bf16.xpose.msra.mxu0 %v388
    %399 = vmatprep.subr.bf16.mxu0 0
    %400 = vmatpush1.bf16.xpose.msra.mxu0 %v391
    %401 = vmatprep.subr.bf16.mxu0 0
    %402 = vmatpush1.bf16.xpose.msra.mxu0 0
    %403 = vmatprep.subr.bf16.mxu0 0
    %404 = vmatpush1.bf16.xpose.msra.mxu0 0
    %405 = vmatprep.subr.bf16.mxu0 0
    %406 = vmatpush1.bf16.xpose.msra.mxu0 0
    %407 = vmatprep.subr.bf16.mxu0 0
    %408 = vmatpush1.bf16.xpose.msra.mxu0 0
    %409 = vmatprep.subr.bf16.mxu0 0
    %410 = vmatpush1.bf16.xpose.msra.mxu0 0
    %411 = vmatprep.subr.bf16.mxu0 0
    %412 = vmatpush1.bf16.xpose.msra.mxu0 0
    %413 = vmatprep.subr.bf16.mxu0 0
    %414 = vmatpush1.bf16.xpose.msra.mxu0 0
    %415 = vmatprep.subr.bf16.mxu0 0
    %416 = vmatpush1.bf16.xpose.msra.mxu0 0
    %417 = vmatprep.subr.bf16.mxu0 0
    %418 = vmatpush1.bf16.xpose.msra.mxu0 0
    %419 = vmatprep.subr.bf16.mxu0 0
    %420 = vmatpush1.bf16.xpose.msra.mxu0 0
    %421 = vmatprep.subr.bf16.mxu0 0
    %422 = vmatpush1.bf16.xpose.msra.mxu0 0
    %423 = vmatprep.subr.bf16.mxu0 0
    %424 = vmatpush1.bf16.xpose.msra.mxu0 0
    %425 = vmatprep.mubr.bf16.mxu0 0
    %426 = vmatmul.mubr.bf16.gmra.mrb[0].mxu0 %v379
    %v427 = vpop.f32.mrb[0].mxu0
    %v428 = vadd.f32 %v364, %v427
    %v429 = vpop.f32.mrb[0].mxu0
    %v430 = vpop.f32.mrb[0].mxu0
    %v431 = vadd.f32 %v365, %v430
    %v432 = vpop.f32.mrb[0].mxu0
    %433 = vdwg.mxu0
    %vm434 = vcmask 64512
    %v435 = vsel %vm434, %v358, -inf
    %436 = vmax.xlane.f32.xlu0 %v435
    %v437 = vpop.xlane.xlu0 %436
    %v438 = vsel %vm434, %v361, -inf
    %439 = vmax.xlane.f32.xlu0 %v438
    %v440 = vpop.xlane.xlu0 %439
    %vm441 = vcmask 130048
    %v442 = vsel %vm441, %v428, -inf
    %443 = vmax.xlane.f32.xlu0 %v442
    %v444 = vpop.xlane.xlu0 %443
    %v445 = vsel %vm441, %v431, -inf
    %446 = vmax.xlane.f32.xlu0 %v445
    %v447 = vpop.xlane.xlu0 %446
    %v448 = vmax.f32 %v437, %v444
    %v449 = vmax.f32 %v440, %v447
    %v450 = vsub.f32 %v358, %v448
    %v451 = vsub.f32 %v361, %v449
    %v452 = vmul.f32 %v450, 1.442695
    %v453 = vpow.pop %v452
    %v454 = vmul.f32 %v451, 1.442695
    %v455 = vpow.pop %v454
    %v456 = vsub.f32 %v428, %v448
    %v457 = vsub.f32 %v431, %v449
    %v458 = vmul.f32 %v456, 1.442695
    %v459 = vpow.pop %v458
    %v460 = vmul.f32 %v457, 1.442695
    %v461 = vpow.pop %v460
    %v462 = vsel %vm434, %v453, 0.0
    %463 = vadd.xlane.f32.xlu0 %v462
    %v464 = vpop.xlane.xlu0 %463
    %v465 = vsel %vm434, %v455, 0.0
    %466 = vadd.xlane.f32.xlu0 %v465
    %v467 = vpop.xlane.xlu0 %466
    %v468 = vsel %vm441, %v459, 0.0
    %469 = vadd.xlane.f32.xlu0 %v468
    %v470 = vpop.xlane.xlu0 %469
    %v471 = vsel %vm441, %v461, 0.0
    %472 = vadd.xlane.f32.xlu0 %v471
    %v473 = vpop.xlane.xlu0 %472
    %v474 = vadd.f32 %v464, %v470
    %v475 = vadd.f32 %v467, %v473
    %v476 = vrcp.pop %v474
    %v477 = vrcp.pop %v475
    %v478 = vmul.f32 %v453, %v476
    %v479 = vmul.f32 %v455, %v477
    %v480 = vpack.c.bf16 %v479, %v478
    %v481 = vmul.f32 %v459, %v476
    %v482 = vmul.f32 %v461, %v477
    %v483 = vpack.c.bf16 %v482, %v481
    %vm484 = vcmask 130112
    %v485 = vsel %vm484, %v358, -inf
    %486 = vmax.xlane.f32.xlu0 %v485
    %v487 = vpop.xlane.xlu0 %486
    %v488 = vsel %vm484, %v361, -inf
    %489 = vmax.xlane.f32.xlu0 %v488
    %v490 = vpop.xlane.xlu0 %489
    %vm491 = vcmask 261248
    %v492 = vsel %vm491, %v428, -inf
    %493 = vmax.xlane.f32.xlu0 %v492
    %v494 = vpop.xlane.xlu0 %493
    %v495 = vsel %vm491, %v431, -inf
    %496 = vmax.xlane.f32.xlu0 %v495
    %v497 = vpop.xlane.xlu0 %496
    %v498 = vmax.f32 %v487, %v494
    %v499 = vmax.f32 %v490, %v497
    %v500 = vsub.f32 %v358, %v498
    %v501 = vsub.f32 %v361, %v499
    %v502 = vmul.f32 %v500, 1.442695
    %v503 = vpow.pop %v502
    %v504 = vmul.f32 %v501, 1.442695
    %v505 = vpow.pop %v504
    %v506 = vsub.f32 %v428, %v498
    %v507 = vsub.f32 %v431, %v499
    %v508 = vmul.f32 %v506, 1.442695
    %v509 = vpow.pop %v508
    %v510 = vmul.f32 %v507, 1.442695
    %v511 = vpow.pop %v510
    %514 = vrot.lane.b32.xlu0 %v503, 120
    %v515 = vpop.permute.xlu0 %514
    %516 = vrot.lane.b32.xlu0 %v505, 120
    %v517 = vpop.permute.xlu0 %516
    %v520 = vsel %vm434, %v515, 0.0
    %521 = vadd.xlane.f32.xlu0 %v520
    %v522 = vpop.xlane.xlu0 %521
    %v523 = vsel %vm434, %v517, 0.0
    %524 = vadd.xlane.f32.xlu0 %v523
    %v525 = vpop.xlane.xlu0 %524
    %528 = vrot.lane.b32.xlu0 %v509, 112
    %v529 = vpop.permute.xlu0 %528
    %530 = vrot.lane.b32.xlu0 %v511, 112
    %v531 = vpop.permute.xlu0 %530
    %v534 = vsel %vm441, %v529, 0.0
    %535 = vadd.xlane.f32.xlu0 %v534
    %v536 = vpop.xlane.xlu0 %535
    %v537 = vsel %vm441, %v531, 0.0
    %538 = vadd.xlane.f32.xlu0 %v537
    %v539 = vpop.xlane.xlu0 %538
    %v540 = vadd.f32 %v522, %v536
    %v541 = vadd.f32 %v525, %v539
    %v542 = vrcp.pop %v540
    %v543 = vrcp.pop %v541
    %v544 = vmul.f32 %v503, %v542
    %v545 = vmul.f32 %v505, %v543
    %v546 = vpack.c.bf16 %v545, %v544
    %v547 = vmul.f32 %v509, %v542
    %v548 = vmul.f32 %v511, %v543
    %v549 = vpack.c.bf16 %v548, %v547
    %vm550 = vcmask 195712
    %v551 = vsel %vm550, %v358, -inf
    %552 = vmax.xlane.f32.xlu0 %v551
    %v553 = vpop.xlane.xlu0 %552
    %v554 = vsel %vm550, %v361, -inf
    %555 = vmax.xlane.f32.xlu0 %v554
    %v556 = vpop.xlane.xlu0 %555
    %vm557 = vcmask 392448
    %v558 = vsel %vm557, %v428, -inf
    %559 = vmax.xlane.f32.xlu0 %v558
    %v560 = vpop.xlane.xlu0 %559
    %v561 = vsel %vm557, %v431, -inf
    %562 = vmax.xlane.f32.xlu0 %v561
    %v563 = vpop.xlane.xlu0 %562
    %v564 = vmax.f32 %v553, %v560
    %v565 = vmax.f32 %v556, %v563
    %v566 = vsub.f32 %v358, %v564
    %v567 = vsub.f32 %v361, %v565
    %v568 = vmul.f32 %v566, 1.442695
    %v569 = vpow.pop %v568
    %v570 = vmul.f32 %v567, 1.442695
    %v571 = vpow.pop %v570
    %v572 = vsub.f32 %v428, %v564
    %v573 = vsub.f32 %v431, %v565
    %v574 = vmul.f32 %v572, 1.442695
    %v575 = vpow.pop %v574
    %v576 = vmul.f32 %v573, 1.442695
    %v577 = vpow.pop %v576
    %580 = vrot.lane.b32.xlu0 %v569, 112
    %v581 = vpop.permute.xlu0 %580
    %582 = vrot.lane.b32.xlu0 %v571, 112
    %v583 = vpop.permute.xlu0 %582
    %v586 = vsel %vm434, %v581, 0.0
    %587 = vadd.xlane.f32.xlu0 %v586
    %v588 = vpop.xlane.xlu0 %587
    %v589 = vsel %vm434, %v583, 0.0
    %590 = vadd.xlane.f32.xlu0 %v589
    %v591 = vpop.xlane.xlu0 %590
    %594 = vrot.lane.b32.xlu0 %v575, 96
    %v595 = vpop.permute.xlu0 %594
    %596 = vrot.lane.b32.xlu0 %v577, 96
    %v597 = vpop.permute.xlu0 %596
    %v600 = vsel %vm441, %v595, 0.0
    %601 = vadd.xlane.f32.xlu0 %v600
    %v602 = vpop.xlane.xlu0 %601
    %v603 = vsel %vm441, %v597, 0.0
    %604 = vadd.xlane.f32.xlu0 %v603
    %v605 = vpop.xlane.xlu0 %604
    %v606 = vadd.f32 %v588, %v602
    %v607 = vadd.f32 %v591, %v605
    %v608 = vrcp.pop %v606
    %v609 = vrcp.pop %v607
    %v610 = vmul.f32 %v569, %v608
    %v611 = vmul.f32 %v571, %v609
    %v612 = vpack.c.bf16 %v611, %v610
    %v613 = vmul.f32 %v575, %v608
    %v614 = vmul.f32 %v577, %v609
    %v615 = vpack.c.bf16 %v614, %v613
    %vm616 = vcmask 261312
    %v617 = vsel %vm616, %v358, -inf
    %618 = vmax.xlane.f32.xlu0 %v617
    %v619 = vpop.xlane.xlu0 %618
    %v620 = vsel %vm616, %v361, -inf
    %621 = vmax.xlane.f32.xlu0 %v620
    %v622 = vpop.xlane.xlu0 %621
    %vm623 = vcmask 523648
    %v624 = vsel %vm623, %v428, -inf
    %625 = vmax.xlane.f32.xlu0 %v624
    %v626 = vpop.xlane.xlu0 %625
    %v627 = vsel %vm623, %v431, -inf
    %628 = vmax.xlane.f32.xlu0 %v627
    %v629 = vpop.xlane.xlu0 %628
    %v630 = vmax.f32 %v619, %v626
    %v631 = vmax.f32 %v622, %v629
    %v632 = vsub.f32 %v358, %v630
    %v633 = vsub.f32 %v361, %v631
    %v634 = vmul.f32 %v632, 1.442695
    %v635 = vpow.pop %v634
    %v636 = vmul.f32 %v633, 1.442695
    %v637 = vpow.pop %v636
    %v638 = vsub.f32 %v428, %v630
    %v639 = vsub.f32 %v431, %v631
    %v640 = vmul.f32 %v638, 1.442695
    %v641 = vpow.pop %v640
    %v642 = vmul.f32 %v639, 1.442695
    %v643 = vpow.pop %v642
    %646 = vrot.lane.b32.xlu0 %v635, 104
    %v647 = vpop.permute.xlu0 %646
    %648 = vrot.lane.b32.xlu0 %v637, 104
    %v649 = vpop.permute.xlu0 %648
    %v652 = vsel %vm434, %v647, 0.0
    %653 = vadd.xlane.f32.xlu0 %v652
    %v654 = vpop.xlane.xlu0 %653
    %v655 = vsel %vm434, %v649, 0.0
    %656 = vadd.xlane.f32.xlu0 %v655
    %v657 = vpop.xlane.xlu0 %656
    %660 = vrot.lane.b32.xlu0 %v641, 80
    %v661 = vpop.permute.xlu0 %660
    %662 = vrot.lane.b32.xlu0 %v643, 80
    %v663 = vpop.permute.xlu0 %662
    %v666 = vsel %vm441, %v661, 0.0
    %667 = vadd.xlane.f32.xlu0 %v666
    %v668 = vpop.xlane.xlu0 %667
    %v669 = vsel %vm441, %v663, 0.0
    %670 = vadd.xlane.f32.xlu0 %v669
    %v671 = vpop.xlane.xlu0 %670
    %v672 = vadd.f32 %v654, %v668
    %v673 = vadd.f32 %v657, %v671
    %v674 = vrcp.pop %v672
    %v675 = vrcp.pop %v673
    %v676 = vmul.f32 %v635, %v674
    %v677 = vmul.f32 %v637, %v675
    %v678 = vpack.c.bf16 %v677, %v676
    %v679 = vmul.f32 %v641, %v674
    %v680 = vmul.f32 %v643, %v675
    %v681 = vpack.c.bf16 %v680, %v679
    %v684 = vsel %vm434, %v480, %v546
    %v686 = vsel %vm441, %v684, %v612
    %vm687 = vcmask 195584
    %v689 = vsel %vm687, %v686, %v678
    %v692 = vsel %vm441, %v483, %v549
    %v694 = vsel %vm147, %v692, %v615
    %vm695 = vcmask 392192
    %v697 = vsel %vm695, %v694, %v681
    %v698 = vld [vmem:[#allocation10] sm:$0xf]
    %v699 = vld [vmem:[#allocation10 + $0x4] sm:$0xf]
    %v700 = vld [vmem:[#allocation10 + $0x8] sm:$0xf]
    %v701 = vld [vmem:[#allocation10 + $0xc] sm:$0xf]
    %706 = vrot.lane.b32.xlu0 %v293, 32
    %v707 = vpop.permute.xlu0 %706
    %708 = vrot.lane.b32.xlu0 %v294, 32
    %v709 = vpop.permute.xlu0 %708
    %710 = vrot.lane.b32.xlu0 %v295, 32
    %v711 = vpop.permute.xlu0 %710
    %712 = vrot.lane.b32.xlu0 %v296, 32
    %v713 = vpop.permute.xlu0 %712
    %vm718 = vcmask 523264
    %v719 = vsel %vm718, %v697, 0
    %721 = vmatprep.subr.bf16.mxu0 0
    %722 = vmatpush1.bf16.msra.mxu0 %v707
    %723 = vmatprep.subr.bf16.mxu0 0
    %724 = vmatpush1.bf16.msra.mxu0 %v709
    %725 = vmatprep.subr.bf16.mxu0 0
    %726 = vmatpush1.bf16.msra.mxu0 %v711
    %727 = vmatprep.subr.bf16.mxu0 0
    %728 = vmatpush1.bf16.msra.mxu0 %v713
    %729 = vmatprep.subr.bf16.mxu0 0
    %730 = vmatpush1.bf16.msra.mxu0 0
    %731 = vmatprep.subr.bf16.mxu0 0
    %732 = vmatpush1.bf16.msra.mxu0 0
    %733 = vmatprep.subr.bf16.mxu0 0
    %734 = vmatpush1.bf16.msra.mxu0 0
    %735 = vmatprep.subr.bf16.mxu0 0
    %736 = vmatpush1.bf16.msra.mxu0 0
    %737 = vmatprep.subr.bf16.mxu0 0
    %738 = vmatpush1.bf16.msra.mxu0 0
    %739 = vmatprep.subr.bf16.mxu0 0
    %740 = vmatpush1.bf16.msra.mxu0 0
    %741 = vmatprep.subr.bf16.mxu0 0
    %742 = vmatpush1.bf16.msra.mxu0 0
    %743 = vmatprep.subr.bf16.mxu0 0
    %744 = vmatpush1.bf16.msra.mxu0 0
    %745 = vmatprep.subr.bf16.mxu0 0
    %746 = vmatpush1.bf16.msra.mxu0 0
    %747 = vmatprep.subr.bf16.mxu0 0
    %748 = vmatpush1.bf16.msra.mxu0 0
    %749 = vmatprep.subr.bf16.mxu0 0
    %750 = vmatpush1.bf16.msra.mxu0 0
    %751 = vmatprep.subr.bf16.mxu0 0
    %752 = vmatpush1.bf16.msra.mxu0 0
    %753 = vmatprep.mubr.bf16.mxu0 0
    %754 = vmatmul.mubr.bf16.gmra.mrb[0].mxu0 %v719
    %v755 = vpop.f32.mrb[0].mxu0
    %v756 = vadd.f32 0.0, %v755
    %v757 = vpop.f32.mrb[0].mxu0
    %v758 = vpop.f32.mrb[0].mxu0
    %v759 = vadd.f32 0.0, %v758
    %v760 = vpop.f32.mrb[0].mxu0
    %761 = vdwg.mxu0
    %v766 = vunpack.c.l.b16 %v698
    %v767 = vunpack.c.l.b16 %v699
    %v768 = vunpack.c.l.b16 %v700
    %v769 = vunpack.c.l.b16 %v701
    %v770 = vpack.c.b16 %v767, %v766
    %v771 = vpack.c.b16 %v769, %v768
    %v774 = vsel %vm147, %v689, 0
    %776 = vmatprep.subr.bf16.mxu0 0
    %777 = vmatpush1.bf16.msra.mxu0 %v770
    %778 = vmatprep.subr.bf16.mxu0 0
    %779 = vmatpush1.bf16.msra.mxu0 %v771
    %780 = vmatprep.subr.bf16.mxu0 0
    %781 = vmatpush1.bf16.msra.mxu0 0
    %782 = vmatprep.subr.bf16.mxu0 0
    %783 = vmatpush1.bf16.msra.mxu0 0
    %784 = vmatprep.subr.bf16.mxu0 0
    %785 = vmatpush1.bf16.msra.mxu0 0
    %786 = vmatprep.subr.bf16.mxu0 0
    %787 = vmatpush1.bf16.msra.mxu0 0
    %788 = vmatprep.subr.bf16.mxu0 0
    %789 = vmatpush1.bf16.msra.mxu0 0
    %790 = vmatprep.subr.bf16.mxu0 0
    %791 = vmatpush1.bf16.msra.mxu0 0
    %792 = vmatprep.subr.bf16.mxu0 0
    %793 = vmatpush1.bf16.msra.mxu0 0
    %794 = vmatprep.subr.bf16.mxu0 0
    %795 = vmatpush1.bf16.msra.mxu0 0
    %796 = vmatprep.subr.bf16.mxu0 0
    %797 = vmatpush1.bf16.msra.mxu0 0
    %798 = vmatprep.subr.bf16.mxu0 0
    %799 = vmatpush1.bf16.msra.mxu0 0
    %800 = vmatprep.subr.bf16.mxu0 0
    %801 = vmatpush1.bf16.msra.mxu0 0
    %802 = vmatprep.subr.bf16.mxu0 0
    %803 = vmatpush1.bf16.msra.mxu0 0
    %804 = vmatprep.subr.bf16.mxu0 0
    %805 = vmatpush1.bf16.msra.mxu0 0
    %806 = vmatprep.subr.bf16.mxu0 0
    %807 = vmatpush1.bf16.msra.mxu0 0
    %808 = vmatprep.mubr.bf16.mxu0 0
    %809 = vmatmul.mubr.bf16.gmra.mrb[0].mxu0 %v774
    %v810 = vpop.f32.mrb[0].mxu0
    %v811 = vadd.f32 %v756, %v810
    %v812 = vpop.f32.mrb[0].mxu0
    %v813 = vpop.f32.mrb[0].mxu0
    %v814 = vadd.f32 %v759, %v813
    %v815 = vpop.f32.mrb[0].mxu0
    %816 = vdwg.mxu0
    %v817 = vpack.c.bf16 %v814, %v811
    %v818 = vld [vmem:[%s2] sm:$0xf]
    %v819 = vld [vmem:[%s2 + $0x4] sm:$0xf]
    %v820 = vld [vmem:[%s2 + $0x8] sm:$0xf]
    %v821 = vld [vmem:[%s2 + $0xc] sm:$0xf]
    %v826 = vunpack.c.l.b16 %v818
    %v827 = vunpack.c.l.b16 %v819
    %v828 = vunpack.c.l.b16 %v820
    %v829 = vunpack.c.l.b16 %v821
    %v830 = vpack.c.b16 %v827, %v826
    %v831 = vpack.c.b16 %v829, %v828
    %v835 = vsel %vm147, %v817, 0
    %837 = vmatprep.subr.bf16.mxu0 0
    %838 = vmatpush1.bf16.msra.mxu0 %v830
    %839 = vmatprep.subr.bf16.mxu0 0
    %840 = vmatpush1.bf16.msra.mxu0 %v831
    %841 = vmatprep.subr.bf16.mxu0 0
    %842 = vmatpush1.bf16.msra.mxu0 0
    %843 = vmatprep.subr.bf16.mxu0 0
    %844 = vmatpush1.bf16.msra.mxu0 0
    %845 = vmatprep.subr.bf16.mxu0 0
    %846 = vmatpush1.bf16.msra.mxu0 0
    %847 = vmatprep.subr.bf16.mxu0 0
    %848 = vmatpush1.bf16.msra.mxu0 0
    %849 = vmatprep.subr.bf16.mxu0 0
    %850 = vmatpush1.bf16.msra.mxu0 0
    %851 = vmatprep.subr.bf16.mxu0 0
    %852 = vmatpush1.bf16.msra.mxu0 0
    %853 = vmatprep.subr.bf16.mxu0 0
    %854 = vmatpush1.bf16.msra.mxu0 0
    %855 = vmatprep.subr.bf16.mxu0 0
    %856 = vmatpush1.bf16.msra.mxu0 0
    %857 = vmatprep.subr.bf16.mxu0 0
    %858 = vmatpush1.bf16.msra.mxu0 0
    %859 = vmatprep.subr.bf16.mxu0 0
    %860 = vmatpush1.bf16.msra.mxu0 0
    %861 = vmatprep.subr.bf16.mxu0 0
    %862 = vmatpush1.bf16.msra.mxu0 0
    %863 = vmatprep.subr.bf16.mxu0 0
    %864 = vmatpush1.bf16.msra.mxu0 0
    %865 = vmatprep.subr.bf16.mxu0 0
    %866 = vmatpush1.bf16.msra.mxu0 0
    %867 = vmatprep.subr.bf16.mxu0 0
    %868 = vmatpush1.bf16.msra.mxu0 0
    %869 = vmatprep.mubr.bf16.mxu0 0
    %870 = vmatmul.mubr.bf16.gmra.mrb[0].mxu0 %v835
    %v871 = vpop.f32.mrb[0].mxu0
    %v872 = vadd.f32 0.0, %v871
    %v873 = vpop.f32.mrb[0].mxu0
    %v874 = vpop.f32.mrb[0].mxu0
    %v875 = vadd.f32 0.0, %v874
    %v876 = vpop.f32.mrb[0].mxu0
    %877 = vdwg.mxu0
    %878 = vst.msk [vmem:[#allocation13] sm:$0xff] %vm147, %v872
    %879 = vst.msk [vmem:[#allocation13 + $0x8] sm:$0xff] %vm147, %v875
    // Predicated region
    $region62: #{tpu_custom_call.1} parent=1 // pred_check
      _
    $region63: #{tpu_custom_call.1} parent=1 // pred_check_branch
      %881 = sbr.rel (0) target = $region65
    $region64: #{tpu_custom_call.1} parent=1 // pred_region
      %s883 = ssub.s32 256, 256
      %884 = vsyncadd [#allocation4], %s883
      %s885 = sshll.u32 [#allocation13], 4
      %s886 = int_to_ptr.vmem [resolvable:$true] %s885
      %891 = dma.vmem_to_hbm [thread:$0]  %s886, 256, %s9, [#allocation4], 128, 128, 8
    $region65: #{tpu_custom_call.1} parent=1 // pred_fallthru
      _
    // Predicated region
    $region66: #{tpu_custom_call.1} parent=1 // pred_check
      _
    $region67: #{tpu_custom_call.1} parent=1 // pred_check_branch
      %893 = sbr.rel (0) target = $region69
    $region68: #{tpu_custom_call.1} parent=1 // pred_region
      %894 = dma.done [#allocation4], 256
    $region69: #{tpu_custom_call.1} parent=1 // pred_fallthru
      _
    %895 = vsyncpa [#allocation3], 1
    %896 = vsyncpa [#allocation6], 1
    %897 = vsyncpa [#allocation9], 1
    %898 = vsyncpa [#allocation12], 1
    %899 = vsyncpa [#allocation4], 1

</llo_original>
